<compile_context>
chip_gen: v7x
topology: tpu7x:2x2x1
jax: 0.10.0
libtpu: 0.0.40
codegen_flags: <defaults>
</compile_context>

<pallas_src>
import jax
import jax.numpy as jnp
from jax.experimental import pallas as pl
from jax.experimental.pallas import tpu as pltpu


def _make_gnn_kernel(TB, N, E):
    """Kernel factory; TB/N/E are static per-compile block constants."""
    f32 = jnp.float32
    bf16 = jnp.bfloat16

    def kernel(x_ref, e_ref, s_ref, dinv_ref,
               w1_ref, b1_ref, w2_ref, b2_ref,
               wr_ref, br_ref,
               w3_ref, b3_ref, w4_ref, b4_ref, w5_ref, b5_ref,
               out_ref, eh_ref, agg_ref):
        H = w2_ref.shape[1]

        # ---- edge_filter: Linear -> SiLU -> Linear (batch folded into rows) ----
        h = jnp.dot(e_ref[...].astype(bf16), w1_ref[...],
                    preferred_element_type=f32) + b1_ref[...]
        h = h * jax.nn.sigmoid(h)                       # SiLU in f32 (EUP)
        eh = jnp.dot(h.astype(bf16), w2_ref[...],
                     preferred_element_type=f32) + b2_ref[...]
        eh_ref[...] = eh.astype(bf16)

        # ---- scatter(edge_attr, edges[1], dim=1, reduce='mean') ----
        # per batch element: agg_b = (1/deg) * (onehot01 @ eh_b)
        # zero-in-degree nodes stay exactly 0 (matches scatter-mean semantics).
        s01 = s_ref[...]                                      # [N, E] bf16, exact 0/1
        dinv = jnp.broadcast_to(dinv_ref[...], (N, H))        # hoisted f32 broadcast

        def agg_one(off_e, off_n):
            eh_b = eh_ref[pl.ds(off_e, E), :]
            agg_ref[pl.ds(off_n, N), :] = dinv * jnp.dot(
                s01, eh_b, preferred_element_type=f32)

        if TB <= 8:                               # static unroll, static slices
            for b in range(TB):
                agg_one(b * E, b * N)
        else:                                     # in-kernel loop for large TB
            @pl.loop(0, TB)
            def _(b):
                off_e, off_n = b * E, b * N
                if E % 8 == 0:
                    off_e = pl.multiple_of(off_e, 8)
                if N % 8 == 0:
                    off_n = pl.multiple_of(off_n, 8)
                agg_one(off_e, off_n)

        # ---- residual: res1(inputs) ----
        res = jnp.dot(x_ref[...].astype(bf16), wr_ref[...],
                      preferred_element_type=f32) + br_ref[...]
        a = agg_ref[...] + res

        # ---- out_mlp: Linear->ReLU->(Dropout)->Linear->ReLU->(Dropout)->Linear ----
        a = jnp.maximum(jnp.dot(a.astype(bf16), w3_ref[...],
                                preferred_element_type=f32) + b3_ref[...], 0.0)
        a = jnp.maximum(jnp.dot(a.astype(bf16), w4_ref[...],
                                preferred_element_type=f32) + b4_ref[...], 0.0)
        out_ref[...] = jnp.dot(a.astype(bf16), w5_ref[...],
                               preferred_element_type=f32) + b5_ref[...]

    return kernel


def _choose_batch_block(B, N, E, Din, Fe, H, Dpad, *,
                        target_rows=256, vmem_budget=40 << 20):
    """Pick how many batch elements (TB) to fold into one grid step.

    Priorities (perf review): >= 2 grid steps (v7x megacore + pipelining),
    then grow TB toward >= 256 matmul rows per step, capped by an explicit
    per-step VMEM formula and (8,128) tileability.
    """
    def step_bytes(tb):
        streamed = 2 * (tb * N * Din * 4 + tb * E * Fe * 4 + tb * N * Dpad * 4)
        scratch = tb * E * H * 2 + tb * N * H * 4
        return streamed + scratch

    divisors = [d for d in range(1, B + 1) if B % d == 0]
    # blocks must be (8,128)-tileable (full-extent blocks are always legal)
    ok = [d for d in divisors
          if d == B or ((d * N) % 8 == 0 and (d * E) % 8 == 0)]
    ok = ok or [B]
    # prefer >= 2 grid steps so the "parallel" axis can split across v7x's two
    # TensorCores and the auto-pipeline overlaps DMA with compute
    cands = [d for d in ok if B // d >= 2] or ok

    tb = cands[0]
    for d in cands:
        if step_bytes(d) > vmem_budget:
            break
        tb = d
        if d * max(E, N) >= target_rows:      # enough MXU rows per step
            break
    return tb, step_bytes(tb)


def gnn_forward(inputs, edge_attr, edges, params, *, batch_block=None,
                vmem_budget_bytes=40 << 20):
    """inputs [B,N,Din] f32, edge_attr [B,E,Fe] f32, edges int [2,E] (edges[1] = receiver)."""
    B, N, Din = inputs.shape
    _, E, Fe = edge_attr.shape
    H = params["w1"].shape[1]
    bf16 = jnp.bfloat16

    Dpad = ((Din + 127) // 128) * 128          # lane-dense output width

    if batch_block is None:
        batch_block, _ = _choose_batch_block(
            B, N, E, Din, Fe, H, Dpad, vmem_budget=vmem_budget_bytes)
    TB = batch_block
    assert B % TB == 0
    num_steps = B // TB

    # Scatter-mean operands. edges is [2, E] per the module, i.e. the receiver
    # indices edges[1] are shared by every batch element (batch-invariant topology).
    recv = edges[1].astype(jnp.int32)
    onehot = (jnp.arange(N)[:, None] == recv[None, :])            # [N, E] bool
    deg = onehot.sum(axis=1, keepdims=True).astype(jnp.float32)   # [N, 1]
    scatter01 = onehot.astype(bf16)                               # exact 0/1 in bf16
    inv_deg = 1.0 / jnp.maximum(deg, 1.0)                         # f32; zero-deg -> agg stays 0

    # Fold batch into the row dim (metadata-only reshape); keep f32, cast to bf16 in-kernel.
    x2 = inputs.reshape(B * N, Din)
    e2 = edge_attr.reshape(B * E, Fe)

    # Weights as bf16 MXU operands; biases f32; final Linear zero-padded to 128 lanes.
    def wb(name):
        return params[name].astype(bf16)
    w5p = jnp.zeros((H, Dpad), bf16).at[:, :Din].set(params["w5"].astype(bf16))
    b5p = jnp.zeros((1, Dpad), jnp.float32).at[:, :Din].set(params["b5"])

    resident = [
        scatter01, inv_deg,
        wb("w1"), params["b1"], wb("w2"), params["b2"],
        wb("wr"), params["br"],
        wb("w3"), params["b3"], wb("w4"), params["b4"],
        w5p, b5p,
    ]
    fixed = lambda i: (0, 0)
    resident_specs = [pl.BlockSpec(a.shape, fixed) for a in resident]

    # Explicit VMEM budget: streamed blocks double-buffered, residents
    # double-buffered by default, scratch single-buffered.
    streamed = 2 * (TB * N * Din * 4 + TB * E * Fe * 4 + TB * N * Dpad * 4)
    scratch = TB * E * H * 2 + TB * N * H * 4
    resident_bytes = 2 * sum(int(a.size) * a.dtype.itemsize for a in resident)
    est = streamed + scratch + resident_bytes
    vmem_limit = int(min(60 << 20, max(16 << 20, 2 * est)))   # stays under v7x 64 MiB

    out = pl.pallas_call(
        _make_gnn_kernel(TB, N, E),
        out_shape=jax.ShapeDtypeStruct((B * N, Dpad), jnp.float32),
        grid=(num_steps,),
        in_specs=[
            pl.BlockSpec((TB * N, Din), lambda i: (i, 0)),   # node features (f32)
            pl.BlockSpec((TB * E, Fe), lambda i: (i, 0)),    # edge features (f32)
            *resident_specs,
        ],
        out_specs=pl.BlockSpec((TB * N, Dpad), lambda i: (i, 0)),
        scratch_shapes=[
            pltpu.VMEM((TB * E, H), bf16),          # edge_filter output (MXU operand)
            pltpu.VMEM((TB * N, H), jnp.float32),   # per-block aggregation
        ],
        compiler_params=pltpu.CompilerParams(
            dimension_semantics=("parallel",),
            vmem_limit_bytes=vmem_limit),
    )(x2, e2, *resident)

    return out[:, :Din].reshape(B, N, Din)


def _linear_init(key, fan_in, fan_out):
    """PyTorch-style uniform(-1/sqrt(fan_in), 1/sqrt(fan_in)); weight stored as [in, out]."""
    kw, kb = jax.random.split(key)
    bound = 1.0 / jnp.sqrt(fan_in)
    w = jax.random.uniform(kw, (fan_in, fan_out), jnp.float32, -bound, bound)
    b = jax.random.uniform(kb, (1, fan_out), jnp.float32, -bound, bound)
    return w, b


def make_params(input_size, hidden_size, num_dims, key):
    num_orient = num_dims * (num_dims - 1) // 2
    num_rel = 3 * num_dims + num_orient
    num_edge_features = num_rel + input_size

    keys = jax.random.split(key, 6)
    w1, b1 = _linear_init(keys[0], num_edge_features, hidden_size)  # edge_filter[0]
    w2, b2 = _linear_init(keys[1], hidden_size, hidden_size)        # edge_filter[2]
    wr, br = _linear_init(keys[2], input_size, hidden_size)         # res1
    w3, b3 = _linear_init(keys[3], hidden_size, hidden_size)        # out_mlp[0]
    w4, b4 = _linear_init(keys[4], hidden_size, hidden_size)        # out_mlp[3]
    w5, b5 = _linear_init(keys[5], hidden_size, input_size)         # out_mlp[6]
    return dict(w1=w1, b1=b1, w2=w2, b2=b2, wr=wr, br=br,
                w3=w3, b3=b3, w4=w4, b4=b4, w5=w5, b5=b5), num_edge_features


def reference_forward(inputs, edge_attr, edges, params, mm_dtype=jnp.float32):
    """Pure-JAX reference of the PyTorch forward (eval mode).
    mm_dtype=bfloat16 mirrors the kernel's MXU-operand casts exactly."""
    f32 = jnp.float32

    def mm(a, w):
        return jnp.einsum("...i,ij->...j", a.astype(mm_dtype), w.astype(mm_dtype),
                          preferred_element_type=f32)

    h = mm(edge_attr, params["w1"]) + params["b1"]
    h = h * jax.nn.sigmoid(h)
    eh = mm(h, params["w2"]) + params["b2"]

    N = inputs.shape[1]
    recv = edges[1]
    onehot = (jnp.arange(N)[:, None] == recv[None, :])
    deg = onehot.sum(axis=1, keepdims=True).astype(f32)
    inv_deg = 1.0 / jnp.maximum(deg, 1.0)
    agg = jnp.einsum("ne,bek->bnk", onehot.astype(mm_dtype), eh.astype(mm_dtype),
                     preferred_element_type=f32)
    agg = agg * inv_deg[None]

    res = mm(inputs, params["wr"]) + params["br"]
    a = agg + res
    a = jax.nn.relu(mm(a, params["w3"]) + params["b3"])
    a = jax.nn.relu(mm(a, params["w4"]) + params["b4"])
    return mm(a, params["w5"]) + params["b5"]


if __name__ == "__main__":
    # Small shapes consistent with the module.
    B, N, E = 2, 8, 16
    input_size, hidden_size, num_dims = 4, 32, 3
    dropout_prob = 0.1  # identity at inference

    key = jax.random.PRNGKey(0)
    k_param, k_x, k_e, k_edges = jax.random.split(key, 4)

    params, num_edge_features = make_params(input_size, hidden_size, num_dims, k_param)

    inputs = jax.random.normal(k_x, (B, N, input_size), jnp.float32)
    edge_attr = jax.random.normal(k_e, (B, E, num_edge_features), jnp.float32)
    edges = jax.random.randint(k_edges, (2, E), 0, N, dtype=jnp.int32)

    out = gnn_forward(inputs, edge_attr, edges, params)
    out = jax.block_until_ready(out)
    assert out.shape == (B, N, input_size)

    # Tight structural check vs. a reference applying the same bf16 MXU-operand casts.
    ref_bf16 = reference_forward(inputs, edge_attr, edges, params, mm_dtype=jnp.bfloat16)
    assert jnp.allclose(out, ref_bf16, atol=5e-4, rtol=5e-4), "mismatch vs bf16-matched reference"

    # Loose sanity check vs. exact f32 PyTorch semantics (bf16 operands perturb ~1e-2).
    ref_f32 = reference_forward(inputs, edge_attr, edges, params, mm_dtype=jnp.float32)
    assert jnp.allclose(out, ref_f32, atol=1e-1, rtol=1e-1), "mismatch vs f32 reference"

    print("KERNEL_OK")
</pallas_src>

<mosaic_0001>
module attributes {stable_mosaic.version = 11 : i64} {
  func.func @kernel(%arg0: i32, %arg1: memref<8x4xf32, #tpu.memory_space<vmem>>, %arg2: memref<16x16xf32, #tpu.memory_space<vmem>>, %arg3: memref<8x16xbf16, #tpu.memory_space<vmem>>, %arg4: memref<8x1xf32, #tpu.memory_space<vmem>>, %arg5: memref<16x32xbf16, #tpu.memory_space<vmem>>, %arg6: memref<1x32xf32, #tpu.memory_space<vmem>>, %arg7: memref<32x32xbf16, #tpu.memory_space<vmem>>, %arg8: memref<1x32xf32, #tpu.memory_space<vmem>>, %arg9: memref<4x32xbf16, #tpu.memory_space<vmem>>, %arg10: memref<1x32xf32, #tpu.memory_space<vmem>>, %arg11: memref<32x32xbf16, #tpu.memory_space<vmem>>, %arg12: memref<1x32xf32, #tpu.memory_space<vmem>>, %arg13: memref<32x32xbf16, #tpu.memory_space<vmem>>, %arg14: memref<1x32xf32, #tpu.memory_space<vmem>>, %arg15: memref<32x128xbf16, #tpu.memory_space<vmem>>, %arg16: memref<1x128xf32, #tpu.memory_space<vmem>>, %arg17: memref<8x128xf32, #tpu.memory_space<vmem>>, %arg18: memref<16x32xbf16, #tpu.memory_space<vmem>>, %arg19: memref<8x32xf32, #tpu.memory_space<vmem>>) attributes {dimension_semantics = [#tpu.dimension_semantics<parallel>], iteration_bounds = array<i64: 2>, scalar_prefetch = 0 : i64, scratch_operands = 2 : i64, tpu.core_type = #tpu.core_type<tc>, window_params = [{transform_indices = @transform_0, window_bounds = array<i64: 8, 4>}, {transform_indices = @transform_1, window_bounds = array<i64: 16, 16>}, {pipeline_mode = #tpu.pipeline_mode<synchronous>, transform_indices = @transform_2, window_bounds = array<i64: 8, 16>}, {pipeline_mode = #tpu.pipeline_mode<synchronous>, transform_indices = @transform_3, window_bounds = array<i64: 8, 1>}, {pipeline_mode = #tpu.pipeline_mode<synchronous>, transform_indices = @transform_4, window_bounds = array<i64: 16, 32>}, {pipeline_mode = #tpu.pipeline_mode<synchronous>, transform_indices = @transform_5, window_bounds = array<i64: 1, 32>}, {pipeline_mode = #tpu.pipeline_mode<synchronous>, transform_indices = @transform_6, window_bounds = array<i64: 32, 32>}, {pipeline_mode = #tpu.pipeline_mode<synchronous>, transform_indices = @transform_7, window_bounds = array<i64: 1, 32>}, {pipeline_mode = #tpu.pipeline_mode<synchronous>, transform_indices = @transform_8, window_bounds = array<i64: 4, 32>}, {pipeline_mode = #tpu.pipeline_mode<synchronous>, transform_indices = @transform_9, window_bounds = array<i64: 1, 32>}, {pipeline_mode = #tpu.pipeline_mode<synchronous>, transform_indices = @transform_10, window_bounds = array<i64: 32, 32>}, {pipeline_mode = #tpu.pipeline_mode<synchronous>, transform_indices = @transform_11, window_bounds = array<i64: 1, 32>}, {pipeline_mode = #tpu.pipeline_mode<synchronous>, transform_indices = @transform_12, window_bounds = array<i64: 32, 32>}, {pipeline_mode = #tpu.pipeline_mode<synchronous>, transform_indices = @transform_13, window_bounds = array<i64: 1, 32>}, {pipeline_mode = #tpu.pipeline_mode<synchronous>, transform_indices = @transform_14, window_bounds = array<i64: 32, 128>}, {pipeline_mode = #tpu.pipeline_mode<synchronous>, transform_indices = @transform_15, window_bounds = array<i64: 1, 128>}, {transform_indices = @transform_16, window_bounds = array<i64: 8, 128>}]} {
    %c0 = arith.constant 0 : index
    %c0_0 = arith.constant 0 : index
    %0 = vector.load %arg2[%c0, %c0_0] : memref<16x16xf32, #tpu.memory_space<vmem>>, vector<16x16xf32>
    %1 = arith.truncf %0 : vector<16x16xf32> to vector<16x16xbf16>
    %c0_1 = arith.constant 0 : index
    %c0_2 = arith.constant 0 : index
    %2 = vector.load %arg5[%c0_1, %c0_2] : memref<16x32xbf16, #tpu.memory_space<vmem>>, vector<16x32xbf16>
    %cst = arith.constant dense<0.000000e+00> : vector<16x32xf32>
    %3 = tpu.matmul %1, %2, %cst {dimension_numbers = #tpu.dot_dimension_numbers<[1], [0], [0], [1], [0, 0, 1, 1], [], []>} : vector<16x16xbf16>, vector<16x32xbf16>, vector<16x32xf32> -> vector<16x32xf32>
    %c0_3 = arith.constant 0 : index
    %c0_4 = arith.constant 0 : index
    %4 = vector.load %arg6[%c0_3, %c0_4] : memref<1x32xf32, #tpu.memory_space<vmem>>, vector<1x32xf32>
    %5 = vector.broadcast %4 : vector<1x32xf32> to vector<16x32xf32>
    %6 = arith.addf %3, %5 : vector<16x32xf32>
    %7 = arith.negf %6 : vector<16x32xf32>
    %8 = math.exp %7 : vector<16x32xf32>
    %cst_5 = arith.constant 1.000000e+00 : f32
    %9 = vector.broadcast %cst_5 : f32 to vector<16x32xf32>
    %10 = arith.addf %9, %8 : vector<16x32xf32>
    %11 = arith.divf %9, %10 : vector<16x32xf32>
    %12 = arith.mulf %6, %11 : vector<16x32xf32>
    %13 = arith.truncf %12 : vector<16x32xf32> to vector<16x32xbf16>
    %c0_6 = arith.constant 0 : index
    %c0_7 = arith.constant 0 : index
    %14 = vector.load %arg7[%c0_6, %c0_7] : memref<32x32xbf16, #tpu.memory_space<vmem>>, vector<32x32xbf16>
    %cst_8 = arith.constant dense<0.000000e+00> : vector<16x32xf32>
    %15 = tpu.matmul %13, %14, %cst_8 {dimension_numbers = #tpu.dot_dimension_numbers<[1], [0], [0], [1], [0, 0, 1, 1], [], []>} : vector<16x32xbf16>, vector<32x32xbf16>, vector<16x32xf32> -> vector<16x32xf32>
    %c0_9 = arith.constant 0 : index
    %c0_10 = arith.constant 0 : index
    %16 = vector.load %arg8[%c0_9, %c0_10] : memref<1x32xf32, #tpu.memory_space<vmem>>, vector<1x32xf32>
    %17 = vector.broadcast %16 : vector<1x32xf32> to vector<16x32xf32>
    %18 = arith.addf %15, %17 : vector<16x32xf32>
    %19 = arith.truncf %18 : vector<16x32xf32> to vector<16x32xbf16>
    %c0_11 = arith.constant 0 : index
    %c0_12 = arith.constant 0 : index
    %20 = vector.load %arg18[%c0_11, %c0_12] : memref<16x32xbf16, #tpu.memory_space<vmem>>, vector<16x32xbf16>
    tpu.vector_store %arg18[%c0_11, %c0_12], %19 {strides = array<i32>} : memref<16x32xbf16, #tpu.memory_space<vmem>>, vector<16x32xbf16>,
    %c0_13 = arith.constant 0 : index
    %c0_14 = arith.constant 0 : index
    %21 = vector.load %arg3[%c0_13, %c0_14] : memref<8x16xbf16, #tpu.memory_space<vmem>>, vector<8x16xbf16>
    %c0_15 = arith.constant 0 : index
    %c0_16 = arith.constant 0 : index
    %22 = vector.load %arg4[%c0_15, %c0_16] : memref<8x1xf32, #tpu.memory_space<vmem>>, vector<8x1xf32>
    %23 = vector.shape_cast %22 : vector<8x1xf32> to vector<8x1xf32>
    %24 = vector.broadcast %23 : vector<8x1xf32> to vector<8x32xf32>
    %c0_17 = arith.constant 0 : index
    %c0_18 = arith.constant 0 : index
    %25 = vector.load %arg18[%c0_17, %c0_18] : memref<16x32xbf16, #tpu.memory_space<vmem>>, vector<16x32xbf16>
    %cst_19 = arith.constant dense<0.000000e+00> : vector<8x32xf32>
    %26 = tpu.matmul %21, %25, %cst_19 {dimension_numbers = #tpu.dot_dimension_numbers<[1], [0], [0], [1], [0, 0, 1, 1], [], []>} : vector<8x16xbf16>, vector<16x32xbf16>, vector<8x32xf32> -> vector<8x32xf32>
    %27 = arith.mulf %24, %26 : vector<8x32xf32>
    %c0_20 = arith.constant 0 : index
    %c0_21 = arith.constant 0 : index
    %28 = vector.load %arg19[%c0_20, %c0_21] : memref<8x32xf32, #tpu.memory_space<vmem>>, vector<8x32xf32>
    tpu.vector_store %arg19[%c0_20, %c0_21], %27 {strides = array<i32>} : memref<8x32xf32, #tpu.memory_space<vmem>>, vector<8x32xf32>,
    %c0_22 = arith.constant 0 : index
    %c0_23 = arith.constant 0 : index
    %29 = vector.load %arg1[%c0_22, %c0_23] : memref<8x4xf32, #tpu.memory_space<vmem>>, vector<8x4xf32>
    %30 = arith.truncf %29 : vector<8x4xf32> to vector<8x4xbf16>
    %c0_24 = arith.constant 0 : index
    %c0_25 = arith.constant 0 : index
    %31 = vector.load %arg9[%c0_24, %c0_25] : memref<4x32xbf16, #tpu.memory_space<vmem>>, vector<4x32xbf16>
    %cst_26 = arith.constant dense<0.000000e+00> : vector<8x32xf32>
    %32 = tpu.matmul %30, %31, %cst_26 {dimension_numbers = #tpu.dot_dimension_numbers<[1], [0], [0], [1], [0, 0, 1, 1], [], []>} : vector<8x4xbf16>, vector<4x32xbf16>, vector<8x32xf32> -> vector<8x32xf32>
    %c0_27 = arith.constant 0 : index
    %c0_28 = arith.constant 0 : index
    %33 = vector.load %arg10[%c0_27, %c0_28] : memref<1x32xf32, #tpu.memory_space<vmem>>, vector<1x32xf32>
    %34 = vector.broadcast %33 : vector<1x32xf32> to vector<8x32xf32>
    %35 = arith.addf %32, %34 : vector<8x32xf32>
    %c0_29 = arith.constant 0 : index
    %c0_30 = arith.constant 0 : index
    %36 = vector.load %arg19[%c0_29, %c0_30] : memref<8x32xf32, #tpu.memory_space<vmem>>, vector<8x32xf32>
    %37 = arith.addf %36, %35 : vector<8x32xf32>
    %38 = arith.truncf %37 : vector<8x32xf32> to vector<8x32xbf16>
    %c0_31 = arith.constant 0 : index
    %c0_32 = arith.constant 0 : index
    %39 = vector.load %arg11[%c0_31, %c0_32] : memref<32x32xbf16, #tpu.memory_space<vmem>>, vector<32x32xbf16>
    %cst_33 = arith.constant dense<0.000000e+00> : vector<8x32xf32>
    %40 = tpu.matmul %38, %39, %cst_33 {dimension_numbers = #tpu.dot_dimension_numbers<[1], [0], [0], [1], [0, 0, 1, 1], [], []>} : vector<8x32xbf16>, vector<32x32xbf16>, vector<8x32xf32> -> vector<8x32xf32>
    %c0_34 = arith.constant 0 : index
    %c0_35 = arith.constant 0 : index
    %41 = vector.load %arg12[%c0_34, %c0_35] : memref<1x32xf32, #tpu.memory_space<vmem>>, vector<1x32xf32>
    %42 = vector.broadcast %41 : vector<1x32xf32> to vector<8x32xf32>
    %43 = arith.addf %40, %42 : vector<8x32xf32>
    %cst_36 = arith.constant 0.000000e+00 : f32
    %44 = vector.broadcast %cst_36 : f32 to vector<8x32xf32>
    %45 = arith.maximumf %43, %44 : vector<8x32xf32>
    %46 = arith.truncf %45 : vector<8x32xf32> to vector<8x32xbf16>
    %c0_37 = arith.constant 0 : index
    %c0_38 = arith.constant 0 : index
    %47 = vector.load %arg13[%c0_37, %c0_38] : memref<32x32xbf16, #tpu.memory_space<vmem>>, vector<32x32xbf16>
    %cst_39 = arith.constant dense<0.000000e+00> : vector<8x32xf32>
    %48 = tpu.matmul %46, %47, %cst_39 {dimension_numbers = #tpu.dot_dimension_numbers<[1], [0], [0], [1], [0, 0, 1, 1], [], []>} : vector<8x32xbf16>, vector<32x32xbf16>, vector<8x32xf32> -> vector<8x32xf32>
    %c0_40 = arith.constant 0 : index
    %c0_41 = arith.constant 0 : index
    %49 = vector.load %arg14[%c0_40, %c0_41] : memref<1x32xf32, #tpu.memory_space<vmem>>, vector<1x32xf32>
    %50 = vector.broadcast %49 : vector<1x32xf32> to vector<8x32xf32>
    %51 = arith.addf %48, %50 : vector<8x32xf32>
    %cst_42 = arith.constant 0.000000e+00 : f32
    %52 = vector.broadcast %cst_42 : f32 to vector<8x32xf32>
    %53 = arith.maximumf %51, %52 : vector<8x32xf32>
    %54 = arith.truncf %53 : vector<8x32xf32> to vector<8x32xbf16>
    %c0_43 = arith.constant 0 : index
    %c0_44 = arith.constant 0 : index
    %55 = vector.load %arg15[%c0_43, %c0_44] : memref<32x128xbf16, #tpu.memory_space<vmem>>, vector<32x128xbf16>
    %cst_45 = arith.constant dense<0.000000e+00> : vector<8x128xf32>
    %56 = tpu.matmul %54, %55, %cst_45 {dimension_numbers = #tpu.dot_dimension_numbers<[1], [0], [0], [1], [0, 0, 1, 1], [], []>} : vector<8x32xbf16>, vector<32x128xbf16>, vector<8x128xf32> -> vector<8x128xf32>
    %c0_46 = arith.constant 0 : index
    %c0_47 = arith.constant 0 : index
    %57 = vector.load %arg16[%c0_46, %c0_47] : memref<1x128xf32, #tpu.memory_space<vmem>>, vector<1x128xf32>
    %58 = vector.broadcast %57 : vector<1x128xf32> to vector<8x128xf32>
    %59 = arith.addf %56, %58 : vector<8x128xf32>
    %c0_48 = arith.constant 0 : index
    %c0_49 = arith.constant 0 : index
    %60 = vector.load %arg17[%c0_48, %c0_49] : memref<8x128xf32, #tpu.memory_space<vmem>>, vector<8x128xf32>
    tpu.vector_store %arg17[%c0_48, %c0_49], %59 {strides = array<i32>} : memref<8x128xf32, #tpu.memory_space<vmem>>, vector<8x128xf32>,
    return
  }
  func.func @transform_0(%arg0: i32) -> (i32, i32) {
    %c0_i32 = arith.constant 0 : i32
    %c0_i32_0 = arith.constant 0 : i32
    return %arg0, %c0_i32 : i32, i32
  }
  func.func @transform_1(%arg0: i32) -> (i32, i32) {
    %c0_i32 = arith.constant 0 : i32
    %c0_i32_0 = arith.constant 0 : i32
    return %arg0, %c0_i32 : i32, i32
  }
  func.func @transform_2(%arg0: i32) -> (i32, i32) {
    %c0_i32 = arith.constant 0 : i32
    %c0_i32_0 = arith.constant 0 : i32
    %c0_i32_1 = arith.constant 0 : i32
    return %c0_i32, %c0_i32_0 : i32, i32
  }
  func.func @transform_3(%arg0: i32) -> (i32, i32) {
    %c0_i32 = arith.constant 0 : i32
    %c0_i32_0 = arith.constant 0 : i32
    %c0_i32_1 = arith.constant 0 : i32
    return %c0_i32, %c0_i32_0 : i32, i32
  }
  func.func @transform_4(%arg0: i32) -> (i32, i32) {
    %c0_i32 = arith.constant 0 : i32
    %c0_i32_0 = arith.constant 0 : i32
    %c0_i32_1 = arith.constant 0 : i32
    return %c0_i32, %c0_i32_0 : i32, i32
  }
  func.func @transform_5(%arg0: i32) -> (i32, i32) {
    %c0_i32 = arith.constant 0 : i32
    %c0_i32_0 = arith.constant 0 : i32
    %c0_i32_1 = arith.constant 0 : i32
    return %c0_i32, %c0_i32_0 : i32, i32
  }
  func.func @transform_6(%arg0: i32) -> (i32, i32) {
    %c0_i32 = arith.constant 0 : i32
    %c0_i32_0 = arith.constant 0 : i32
    %c0_i32_1 = arith.constant 0 : i32
    return %c0_i32, %c0_i32_0 : i32, i32
  }
  func.func @transform_7(%arg0: i32) -> (i32, i32) {
    %c0_i32 = arith.constant 0 : i32
    %c0_i32_0 = arith.constant 0 : i32
    %c0_i32_1 = arith.constant 0 : i32
    return %c0_i32, %c0_i32_0 : i32, i32
  }
  func.func @transform_8(%arg0: i32) -> (i32, i32) {
    %c0_i32 = arith.constant 0 : i32
    %c0_i32_0 = arith.constant 0 : i32
    %c0_i32_1 = arith.constant 0 : i32
    return %c0_i32, %c0_i32_0 : i32, i32
  }
  func.func @transform_9(%arg0: i32) -> (i32, i32) {
    %c0_i32 = arith.constant 0 : i32
    %c0_i32_0 = arith.constant 0 : i32
    %c0_i32_1 = arith.constant 0 : i32
    return %c0_i32, %c0_i32_0 : i32, i32
  }
  func.func @transform_10(%arg0: i32) -> (i32, i32) {
    %c0_i32 = arith.constant 0 : i32
    %c0_i32_0 = arith.constant 0 : i32
    %c0_i32_1 = arith.constant 0 : i32
    return %c0_i32, %c0_i32_0 : i32, i32
  }
  func.func @transform_11(%arg0: i32) -> (i32, i32) {
    %c0_i32 = arith.constant 0 : i32
    %c0_i32_0 = arith.constant 0 : i32
    %c0_i32_1 = arith.constant 0 : i32
    return %c0_i32, %c0_i32_0 : i32, i32
  }
  func.func @transform_12(%arg0: i32) -> (i32, i32) {
    %c0_i32 = arith.constant 0 : i32
    %c0_i32_0 = arith.constant 0 : i32
    %c0_i32_1 = arith.constant 0 : i32
    return %c0_i32, %c0_i32_0 : i32, i32
  }
  func.func @transform_13(%arg0: i32) -> (i32, i32) {
    %c0_i32 = arith.constant 0 : i32
    %c0_i32_0 = arith.constant 0 : i32
    %c0_i32_1 = arith.constant 0 : i32
    return %c0_i32, %c0_i32_0 : i32, i32
  }
  func.func @transform_14(%arg0: i32) -> (i32, i32) {
    %c0_i32 = arith.constant 0 : i32
    %c0_i32_0 = arith.constant 0 : i32
    %c0_i32_1 = arith.constant 0 : i32
    return %c0_i32, %c0_i32_0 : i32, i32
  }
  func.func @transform_15(%arg0: i32) -> (i32, i32) {
    %c0_i32 = arith.constant 0 : i32
    %c0_i32_0 = arith.constant 0 : i32
    %c0_i32_1 = arith.constant 0 : i32
    return %c0_i32, %c0_i32_0 : i32, i32
  }
  func.func @transform_16(%arg0: i32) -> (i32, i32) {
    %c0_i32 = arith.constant 0 : i32
    %c0_i32_0 = arith.constant 0 : i32
    return %arg0, %c0_i32 : i32, i32
  }
}

</mosaic_0001>

<llo_original>
// kernel: tpu_custom_call.1
$region0: #{tpu_custom_call.1}
  #allocation0 [shape = 'u32[]', space=smem, size = 0x4, offset = 0x4, fixed_abs, tag = 'smem constant byte address 0x4 - core index']
  #allocation1 [shape = 'u32[144,128]{1,0:T(1,128)}', space=vmem, size = 0x12000, scoped, tag = 'internal scratch']
  #allocation2 [shape = 'bf16[16,32]{1,0:T(16,128)(2,1)}', space=vmem, size = 0x1000, scoped, tag = 'scratch operand']
  #allocation3 [shape = 'f32[8,32]{1,0:T(8,128)}', space=vmem, size = 0x1000, scoped, tag = 'scratch operand']
  %s0 = inlined_call_operand.vmem [shape: f32[16,4], index: 0, kind: input, shape index: {}]
  %s1 = inlined_call_operand.vmem [shape: f32[32,16], index: 1, kind: input, shape index: {}]
  %s2 = inlined_call_operand.hbm [shape: bf16[8,16], index: 2, kind: input, shape index: {}]
  %s3 = inlined_call_operand.vmem [shape: f32[8,1], index: 3, kind: input, shape index: {}]
  %s4 = inlined_call_operand.vmem [shape: bf16[16,32], index: 4, kind: input, shape index: {}]
  %s5 = inlined_call_operand.vmem [shape: f32[1,32], index: 5, kind: input, shape index: {}]
  %s6 = inlined_call_operand.vmem [shape: bf16[32,32], index: 6, kind: input, shape index: {}]
  %s7 = inlined_call_operand.vmem [shape: f32[1,32], index: 7, kind: input, shape index: {}]
  %s8 = inlined_call_operand.vmem [shape: bf16[4,32], index: 8, kind: input, shape index: {}]
  %s9 = inlined_call_operand.vmem [shape: f32[1,32], index: 9, kind: input, shape index: {}]
  %s10 = inlined_call_operand.vmem [shape: bf16[32,32], index: 10, kind: input, shape index: {}]
  %s11 = inlined_call_operand.vmem [shape: f32[1,32], index: 11, kind: input, shape index: {}]
  %s12 = inlined_call_operand.vmem [shape: bf16[32,32], index: 12, kind: input, shape index: {}]
  %s13 = inlined_call_operand.vmem [shape: f32[1,32], index: 13, kind: input, shape index: {}]
  %s14 = inlined_call_operand.vmem [shape: bf16[32,128], index: 14, kind: input, shape index: {}]
  %s15 = inlined_call_operand.vmem [shape: f32[1,128], index: 15, kind: input, shape index: {}]
  %s16 = inlined_call_operand.hbm [shape: f32[16,128], index: 16, kind: output, shape index: {}]
  %s17 = sld [smem:[#allocation0]]
  $region101: #{tpu_custom_call.1} parent=0
    _
  %s19 = ssub.s32 1, %s17
  %s20 = scalar_select 0, %s19, %s17
  $region1: #{tpu_custom_call.1} parent=0
    #allocation4 [shape = 'u8[2048]{0}', space=vmem, size = 0x800, scoped, tag = 'input window, operand 2, single buffered']
    #allocation5 [shape = 's32[2]{0}', space=sflag, size = 0x8, scoped, tag = 'scoped memory for tpu_custom_call.1']
    #allocation6 [shape = 's32[2]{0}', space=sflag, size = 0x8, scoped, tag = 'scoped memory for tpu_custom_call.1']
    #allocation7 [shape = 'u8[8192]{0}', space=vmem, size = 0x2000, scoped, tag = 'output window, operand 0']
    %21 = vsyncpa [#allocation5], 0
    %22 = vsyncpa [#allocation6], 0
    %s23 = scalar_lea.sflag [#allocation6], 1
    %24 = vsyncpa %s23, 0
    loop: start=0, step=1, limit=4
    $region2: #{tpu_custom_call.1} parent=1 // loop_pre_header
      _
    $region3: #{tpu_custom_call.1} parent=1 // loop_header
      %s26 = sphi 0, %s30
      %p27 = scmp.ge.s32.totalorder %s26, 4
      %s36 = sphi 0, %s38
      %s39 = sphi 0, %s36
      %s40 = sphi 0, %s39
      %s56 = sphi 0, %s40
      %s62 = sphi 0, %s64
      %s65 = sphi 0, %s62
      %s66 = sphi 0, %s65
      %s82 = sphi 0, %s66
      %s86 = sphi 0, %s86
      %s88 = sphi 0, %s86
      %s89 = sphi 0, %s88
      %s103 = sphi 0, %s89
      %s107 = sphi 0, %s107
      %s109 = sphi 0, %s107
      %s110 = sphi 0, %s109
      %s124 = sphi 0, %s110
      %s128 = sphi 0, %s128
      %s130 = sphi 0, %s128
      %s131 = sphi 0, %s130
      %s145 = sphi 0, %s131
      %s149 = sphi 0, %s149
      %s151 = sphi 0, %s149
      %s152 = sphi 0, %s151
      %s166 = sphi 0, %s152
      %s170 = sphi 0, %s170
      %s172 = sphi 0, %s170
      %s173 = sphi 0, %s172
      %s187 = sphi 0, %s173
      %s191 = sphi 0, %s191
      %s193 = sphi 0, %s191
      %s194 = sphi 0, %s193
      %s208 = sphi 0, %s194
      %s212 = sphi 0, %s212
      %s214 = sphi 0, %s212
      %s215 = sphi 0, %s214
      %s229 = sphi 0, %s215
      %s233 = sphi 0, %s233
      %s235 = sphi 0, %s233
      %s236 = sphi 0, %s235
      %s250 = sphi 0, %s236
      %s254 = sphi 0, %s254
      %s256 = sphi 0, %s254
      %s257 = sphi 0, %s256
      %s271 = sphi 0, %s257
      %s275 = sphi 0, %s275
      %s277 = sphi 0, %s275
      %s278 = sphi 0, %s277
      %s292 = sphi 0, %s278
      %s296 = sphi 0, %s296
      %s298 = sphi 0, %s296
      %s299 = sphi 0, %s298
      %s313 = sphi 0, %s299
      %s317 = sphi 0, %s317
      %s319 = sphi 0, %s317
      %s320 = sphi 0, %s319
      %s334 = sphi 0, %s320
      %s338 = sphi 0, %s338
      %s340 = sphi 0, %s338
      %s341 = sphi 0, %s340
      %s355 = sphi 0, %s341
      %s359 = sphi 0, %s359
      %s361 = sphi 0, %s359
      %s362 = sphi 0, %s361
      %s376 = sphi 0, %s362
      %s382 = sphi 0, %s384
      %s385 = sphi 0, %s382
      %s386 = sphi 0, %s385
      %s402 = sphi 0, %s386
    $region4: #{tpu_custom_call.1} parent=1 // loop_header_branch
      %29 = sbr.rel (%p27) target = $region8
    $region5: #{tpu_custom_call.1} parent=1 // loop_body
      %s31 = ssub.s32 %s26, 1
      %s32 = ssub.s32 %s26, 2
      %s33 = sadd.s32 %s26, 1
      %s34 = ssub.s32 %s26, %s33
      %p35 = scmp.eq.s32.totalorder %s34, 0
      %s37 = sadd.s32 %s36, 1
      %s38 = scalar_select %p35, %s36, %s37
      %p41 = pneg %p35
      %p42 = scmp.eq.s32.totalorder %s26, 1
      %p43 = por %p41, %p42
      %p44 = scmp.ne.s32.totalorder %s36, %s39
      %p45 = scmp.eq.s32.totalorder %s26, 0
      %p46 = por %p44, %p45
      %p47 = scmp.ne.s32.totalorder %s36, %s39
      %p48 = scmp.eq.s32.totalorder %s31, 1
      %p49 = por %p47, %p48
      %p50 = scmp.ne.s32.totalorder %s39, %s40
      %p51 = scmp.eq.s32.totalorder %s31, 0
      %p52 = por %p50, %p51
      %p53 = scmp.ne.s32.totalorder %s39, %s40
      %p54 = scmp.eq.s32.totalorder %s32, 1
      %p55 = por %p53, %p54
      %p57 = scmp.ne.s32.totalorder %s40, %s56
      %p58 = scmp.eq.s32.totalorder %s32, 0
      %p59 = por %p57, %p58
      %s60 = ssub.s32 %s26, %s33
      %p61 = scmp.eq.s32.totalorder %s60, 0
      %s63 = sadd.s32 %s62, 1
      %s64 = scalar_select %p61, %s62, %s63
      %p67 = pneg %p61
      %p68 = scmp.eq.s32.totalorder %s26, 1
      %p69 = por %p67, %p68
      %p70 = scmp.ne.s32.totalorder %s62, %s65
      %p71 = scmp.eq.s32.totalorder %s26, 0
      %p72 = por %p70, %p71
      %p73 = scmp.ne.s32.totalorder %s62, %s65
      %p74 = scmp.eq.s32.totalorder %s31, 1
      %p75 = por %p73, %p74
      %p76 = scmp.ne.s32.totalorder %s65, %s66
      %p77 = scmp.eq.s32.totalorder %s31, 0
      %p78 = por %p76, %p77
      %p79 = scmp.ne.s32.totalorder %s65, %s66
      %p80 = scmp.eq.s32.totalorder %s32, 1
      %p81 = por %p79, %p80
      %p83 = scmp.ne.s32.totalorder %s66, %s82
      %p84 = scmp.eq.s32.totalorder %s32, 0
      %p85 = por %p83, %p84
      %s87 = sadd.s32 %s86, 1
      %p90 = scmp.eq.s32.totalorder %s26, 1
      %p91 = scmp.ne.s32.totalorder %s86, %s88
      %p92 = scmp.eq.s32.totalorder %s26, 0
      %p93 = por %p91, %p92
      %p94 = scmp.ne.s32.totalorder %s86, %s88
      %p95 = scmp.eq.s32.totalorder %s31, 1
      %p96 = por %p94, %p95
      %p97 = scmp.ne.s32.totalorder %s88, %s89
      %p98 = scmp.eq.s32.totalorder %s31, 0
      %p99 = por %p97, %p98
      %p100 = scmp.ne.s32.totalorder %s88, %s89
      %p101 = scmp.eq.s32.totalorder %s32, 1
      %p102 = por %p100, %p101
      %p104 = scmp.ne.s32.totalorder %s89, %s103
      %p105 = scmp.eq.s32.totalorder %s32, 0
      %p106 = por %p104, %p105
      %s108 = sadd.s32 %s107, 1
      %p111 = scmp.eq.s32.totalorder %s26, 1
      %p112 = scmp.ne.s32.totalorder %s107, %s109
      %p113 = scmp.eq.s32.totalorder %s26, 0
      %p114 = por %p112, %p113
      %p115 = scmp.ne.s32.totalorder %s107, %s109
      %p116 = scmp.eq.s32.totalorder %s31, 1
      %p117 = por %p115, %p116
      %p118 = scmp.ne.s32.totalorder %s109, %s110
      %p119 = scmp.eq.s32.totalorder %s31, 0
      %p120 = por %p118, %p119
      %p121 = scmp.ne.s32.totalorder %s109, %s110
      %p122 = scmp.eq.s32.totalorder %s32, 1
      %p123 = por %p121, %p122
      %p125 = scmp.ne.s32.totalorder %s110, %s124
      %p126 = scmp.eq.s32.totalorder %s32, 0
      %p127 = por %p125, %p126
      %s129 = sadd.s32 %s128, 1
      %p132 = scmp.eq.s32.totalorder %s26, 1
      %p133 = scmp.ne.s32.totalorder %s128, %s130
      %p134 = scmp.eq.s32.totalorder %s26, 0
      %p135 = por %p133, %p134
      %p136 = scmp.ne.s32.totalorder %s128, %s130
      %p137 = scmp.eq.s32.totalorder %s31, 1
      %p138 = por %p136, %p137
      %p139 = scmp.ne.s32.totalorder %s130, %s131
      %p140 = scmp.eq.s32.totalorder %s31, 0
      %p141 = por %p139, %p140
      %p142 = scmp.ne.s32.totalorder %s130, %s131
      %p143 = scmp.eq.s32.totalorder %s32, 1
      %p144 = por %p142, %p143
      %p146 = scmp.ne.s32.totalorder %s131, %s145
      %p147 = scmp.eq.s32.totalorder %s32, 0
      %p148 = por %p146, %p147
      %s150 = sadd.s32 %s149, 1
      %p153 = scmp.eq.s32.totalorder %s26, 1
      %p154 = scmp.ne.s32.totalorder %s149, %s151
      %p155 = scmp.eq.s32.totalorder %s26, 0
      %p156 = por %p154, %p155
      %p157 = scmp.ne.s32.totalorder %s149, %s151
      %p158 = scmp.eq.s32.totalorder %s31, 1
      %p159 = por %p157, %p158
      %p160 = scmp.ne.s32.totalorder %s151, %s152
      %p161 = scmp.eq.s32.totalorder %s31, 0
      %p162 = por %p160, %p161
      %p163 = scmp.ne.s32.totalorder %s151, %s152
      %p164 = scmp.eq.s32.totalorder %s32, 1
      %p165 = por %p163, %p164
      %p167 = scmp.ne.s32.totalorder %s152, %s166
      %p168 = scmp.eq.s32.totalorder %s32, 0
      %p169 = por %p167, %p168
      %s171 = sadd.s32 %s170, 1
      %p174 = scmp.eq.s32.totalorder %s26, 1
      %p175 = scmp.ne.s32.totalorder %s170, %s172
      %p176 = scmp.eq.s32.totalorder %s26, 0
      %p177 = por %p175, %p176
      %p178 = scmp.ne.s32.totalorder %s170, %s172
      %p179 = scmp.eq.s32.totalorder %s31, 1
      %p180 = por %p178, %p179
      %p181 = scmp.ne.s32.totalorder %s172, %s173
      %p182 = scmp.eq.s32.totalorder %s31, 0
      %p183 = por %p181, %p182
      %p184 = scmp.ne.s32.totalorder %s172, %s173
      %p185 = scmp.eq.s32.totalorder %s32, 1
      %p186 = por %p184, %p185
      %p188 = scmp.ne.s32.totalorder %s173, %s187
      %p189 = scmp.eq.s32.totalorder %s32, 0
      %p190 = por %p188, %p189
      %s192 = sadd.s32 %s191, 1
      %p195 = scmp.eq.s32.totalorder %s26, 1
      %p196 = scmp.ne.s32.totalorder %s191, %s193
      %p197 = scmp.eq.s32.totalorder %s26, 0
      %p198 = por %p196, %p197
      %p199 = scmp.ne.s32.totalorder %s191, %s193
      %p200 = scmp.eq.s32.totalorder %s31, 1
      %p201 = por %p199, %p200
      %p202 = scmp.ne.s32.totalorder %s193, %s194
      %p203 = scmp.eq.s32.totalorder %s31, 0
      %p204 = por %p202, %p203
      %p205 = scmp.ne.s32.totalorder %s193, %s194
      %p206 = scmp.eq.s32.totalorder %s32, 1
      %p207 = por %p205, %p206
      %p209 = scmp.ne.s32.totalorder %s194, %s208
      %p210 = scmp.eq.s32.totalorder %s32, 0
      %p211 = por %p209, %p210
      %s213 = sadd.s32 %s212, 1
      %p216 = scmp.eq.s32.totalorder %s26, 1
      %p217 = scmp.ne.s32.totalorder %s212, %s214
      %p218 = scmp.eq.s32.totalorder %s26, 0
      %p219 = por %p217, %p218
      %p220 = scmp.ne.s32.totalorder %s212, %s214
      %p221 = scmp.eq.s32.totalorder %s31, 1
      %p222 = por %p220, %p221
      %p223 = scmp.ne.s32.totalorder %s214, %s215
      %p224 = scmp.eq.s32.totalorder %s31, 0
      %p225 = por %p223, %p224
      %p226 = scmp.ne.s32.totalorder %s214, %s215
      %p227 = scmp.eq.s32.totalorder %s32, 1
      %p228 = por %p226, %p227
      %p230 = scmp.ne.s32.totalorder %s215, %s229
      %p231 = scmp.eq.s32.totalorder %s32, 0
      %p232 = por %p230, %p231
      %s234 = sadd.s32 %s233, 1
      %p237 = scmp.eq.s32.totalorder %s26, 1
      %p238 = scmp.ne.s32.totalorder %s233, %s235
      %p239 = scmp.eq.s32.totalorder %s26, 0
      %p240 = por %p238, %p239
      %p241 = scmp.ne.s32.totalorder %s233, %s235
      %p242 = scmp.eq.s32.totalorder %s31, 1
      %p243 = por %p241, %p242
      %p244 = scmp.ne.s32.totalorder %s235, %s236
      %p245 = scmp.eq.s32.totalorder %s31, 0
      %p246 = por %p244, %p245
      %p247 = scmp.ne.s32.totalorder %s235, %s236
      %p248 = scmp.eq.s32.totalorder %s32, 1
      %p249 = por %p247, %p248
      %p251 = scmp.ne.s32.totalorder %s236, %s250
      %p252 = scmp.eq.s32.totalorder %s32, 0
      %p253 = por %p251, %p252
      %s255 = sadd.s32 %s254, 1
      %p258 = scmp.eq.s32.totalorder %s26, 1
      %p259 = scmp.ne.s32.totalorder %s254, %s256
      %p260 = scmp.eq.s32.totalorder %s26, 0
      %p261 = por %p259, %p260
      %p262 = scmp.ne.s32.totalorder %s254, %s256
      %p263 = scmp.eq.s32.totalorder %s31, 1
      %p264 = por %p262, %p263
      %p265 = scmp.ne.s32.totalorder %s256, %s257
      %p266 = scmp.eq.s32.totalorder %s31, 0
      %p267 = por %p265, %p266
      %p268 = scmp.ne.s32.totalorder %s256, %s257
      %p269 = scmp.eq.s32.totalorder %s32, 1
      %p270 = por %p268, %p269
      %p272 = scmp.ne.s32.totalorder %s257, %s271
      %p273 = scmp.eq.s32.totalorder %s32, 0
      %p274 = por %p272, %p273
      %s276 = sadd.s32 %s275, 1
      %p279 = scmp.eq.s32.totalorder %s26, 1
      %p280 = scmp.ne.s32.totalorder %s275, %s277
      %p281 = scmp.eq.s32.totalorder %s26, 0
      %p282 = por %p280, %p281
      %p283 = scmp.ne.s32.totalorder %s275, %s277
      %p284 = scmp.eq.s32.totalorder %s31, 1
      %p285 = por %p283, %p284
      %p286 = scmp.ne.s32.totalorder %s277, %s278
      %p287 = scmp.eq.s32.totalorder %s31, 0
      %p288 = por %p286, %p287
      %p289 = scmp.ne.s32.totalorder %s277, %s278
      %p290 = scmp.eq.s32.totalorder %s32, 1
      %p291 = por %p289, %p290
      %p293 = scmp.ne.s32.totalorder %s278, %s292
      %p294 = scmp.eq.s32.totalorder %s32, 0
      %p295 = por %p293, %p294
      %s297 = sadd.s32 %s296, 1
      %p300 = scmp.eq.s32.totalorder %s26, 1
      %p301 = scmp.ne.s32.totalorder %s296, %s298
      %p302 = scmp.eq.s32.totalorder %s26, 0
      %p303 = por %p301, %p302
      %p304 = scmp.ne.s32.totalorder %s296, %s298
      %p305 = scmp.eq.s32.totalorder %s31, 1
      %p306 = por %p304, %p305
      %p307 = scmp.ne.s32.totalorder %s298, %s299
      %p308 = scmp.eq.s32.totalorder %s31, 0
      %p309 = por %p307, %p308
      %p310 = scmp.ne.s32.totalorder %s298, %s299
      %p311 = scmp.eq.s32.totalorder %s32, 1
      %p312 = por %p310, %p311
      %p314 = scmp.ne.s32.totalorder %s299, %s313
      %p315 = scmp.eq.s32.totalorder %s32, 0
      %p316 = por %p314, %p315
      %s318 = sadd.s32 %s317, 1
      %p321 = scmp.eq.s32.totalorder %s26, 1
      %p322 = scmp.ne.s32.totalorder %s317, %s319
      %p323 = scmp.eq.s32.totalorder %s26, 0
      %p324 = por %p322, %p323
      %p325 = scmp.ne.s32.totalorder %s317, %s319
      %p326 = scmp.eq.s32.totalorder %s31, 1
      %p327 = por %p325, %p326
      %p328 = scmp.ne.s32.totalorder %s319, %s320
      %p329 = scmp.eq.s32.totalorder %s31, 0
      %p330 = por %p328, %p329
      %p331 = scmp.ne.s32.totalorder %s319, %s320
      %p332 = scmp.eq.s32.totalorder %s32, 1
      %p333 = por %p331, %p332
      %p335 = scmp.ne.s32.totalorder %s320, %s334
      %p336 = scmp.eq.s32.totalorder %s32, 0
      %p337 = por %p335, %p336
      %s339 = sadd.s32 %s338, 1
      %p342 = scmp.eq.s32.totalorder %s26, 1
      %p343 = scmp.ne.s32.totalorder %s338, %s340
      %p344 = scmp.eq.s32.totalorder %s26, 0
      %p345 = por %p343, %p344
      %p346 = scmp.ne.s32.totalorder %s338, %s340
      %p347 = scmp.eq.s32.totalorder %s31, 1
      %p348 = por %p346, %p347
      %p349 = scmp.ne.s32.totalorder %s340, %s341
      %p350 = scmp.eq.s32.totalorder %s31, 0
      %p351 = por %p349, %p350
      %p352 = scmp.ne.s32.totalorder %s340, %s341
      %p353 = scmp.eq.s32.totalorder %s32, 1
      %p354 = por %p352, %p353
      %p356 = scmp.ne.s32.totalorder %s341, %s355
      %p357 = scmp.eq.s32.totalorder %s32, 0
      %p358 = por %p356, %p357
      %s360 = sadd.s32 %s359, 1
      %p363 = scmp.eq.s32.totalorder %s26, 1
      %p364 = scmp.ne.s32.totalorder %s359, %s361
      %p365 = scmp.eq.s32.totalorder %s26, 0
      %p366 = por %p364, %p365
      %p367 = scmp.ne.s32.totalorder %s359, %s361
      %p368 = scmp.eq.s32.totalorder %s31, 1
      %p369 = por %p367, %p368
      %p370 = scmp.ne.s32.totalorder %s361, %s362
      %p371 = scmp.eq.s32.totalorder %s31, 0
      %p372 = por %p370, %p371
      %p373 = scmp.ne.s32.totalorder %s361, %s362
      %p374 = scmp.eq.s32.totalorder %s32, 1
      %p375 = por %p373, %p374
      %p377 = scmp.ne.s32.totalorder %s362, %s376
      %p378 = scmp.eq.s32.totalorder %s32, 0
      %p379 = por %p377, %p378
      %s380 = ssub.s32 %s26, %s33
      %p381 = scmp.eq.s32.totalorder %s380, 0
      %s383 = sadd.s32 %s382, 1
      %s384 = scalar_select %p381, %s382, %s383
      %p387 = pneg %p381
      %p388 = scmp.eq.s32.totalorder %s26, 1
      %p389 = por %p387, %p388
      %p390 = scmp.ne.s32.totalorder %s382, %s385
      %p391 = scmp.eq.s32.totalorder %s26, 0
      %p392 = por %p390, %p391
      %p393 = scmp.ne.s32.totalorder %s382, %s385
      %p394 = scmp.eq.s32.totalorder %s31, 1
      %p395 = por %p393, %p394
      %p396 = scmp.ne.s32.totalorder %s385, %s386
      %p397 = scmp.eq.s32.totalorder %s31, 0
      %p398 = por %p396, %p397
      %p399 = scmp.ne.s32.totalorder %s385, %s386
      %p400 = scmp.eq.s32.totalorder %s32, 1
      %p401 = por %p399, %p400
      %p403 = scmp.ne.s32.totalorder %s386, %s402
      %p404 = scmp.eq.s32.totalorder %s32, 0
      %p405 = por %p403, %p404
      %p406 = scmp.le.s32.totalorder 1, %s26
      %p407 = scmp.lt.s32.totalorder %s26, 3
      %p408 = pnand %p406, %p407
      %p409 = pneg %p408
      // Predicated region
      $region9: #{tpu_custom_call.1} parent=5 // pred_check
        _
      $region10: #{tpu_custom_call.1} parent=5 // pred_check_branch
        %411 = sbr.rel (%p408) target = $region12
      $region11: #{tpu_custom_call.1} parent=5 // pred_region
        %s412 = ssub.s32 %s26, 1
        // Predicated region
        $region13: #{tpu_custom_call.1} parent=11 // pred_check
          %p413 = pneg %p99
        $region14: #{tpu_custom_call.1} parent=11 // pred_check_branch
          %415 = sbr.rel (%p413) target = $region16
        $region15: #{tpu_custom_call.1} parent=11 // pred_region
          %s417 = ssub.s32 64, 64
          %418 = vsyncadd [#allocation5], %s417
          %s420 = sshll.u32 [#allocation4], 4
          %s421 = int_to_ptr.vmem [resolvable:$true] %s420
          %423 = dma.hbm_to_vmem [thread:$0]  %s2, 64, %s421, [#allocation5]
        $region16: #{tpu_custom_call.1} parent=11 // pred_fallthru
          _
        // Predicated region
        $region17: #{tpu_custom_call.1} parent=11 // pred_check
          %p424 = pneg %p120
        $region18: #{tpu_custom_call.1} parent=11 // pred_check_branch
          %426 = sbr.rel (%p424) target = $region20
        $region19: #{tpu_custom_call.1} parent=11 // pred_region
          _
        $region20: #{tpu_custom_call.1} parent=11 // pred_fallthru
          _
        // Predicated region
        $region21: #{tpu_custom_call.1} parent=11 // pred_check
          %p427 = pneg %p141
        $region22: #{tpu_custom_call.1} parent=11 // pred_check_branch
          %429 = sbr.rel (%p427) target = $region24
        $region23: #{tpu_custom_call.1} parent=11 // pred_region
          _
        $region24: #{tpu_custom_call.1} parent=11 // pred_fallthru
          _
        // Predicated region
        $region25: #{tpu_custom_call.1} parent=11 // pred_check
          %p430 = pneg %p162
        $region26: #{tpu_custom_call.1} parent=11 // pred_check_branch
          %432 = sbr.rel (%p430) target = $region28
        $region27: #{tpu_custom_call.1} parent=11 // pred_region
          _
        $region28: #{tpu_custom_call.1} parent=11 // pred_fallthru
          _
        // Predicated region
        $region29: #{tpu_custom_call.1} parent=11 // pred_check
          %p433 = pneg %p183
        $region30: #{tpu_custom_call.1} parent=11 // pred_check_branch
          %435 = sbr.rel (%p433) target = $region32
        $region31: #{tpu_custom_call.1} parent=11 // pred_region
          _
        $region32: #{tpu_custom_call.1} parent=11 // pred_fallthru
          _
        // Predicated region
        $region33: #{tpu_custom_call.1} parent=11 // pred_check
          %p436 = pneg %p204
        $region34: #{tpu_custom_call.1} parent=11 // pred_check_branch
          %438 = sbr.rel (%p436) target = $region36
        $region35: #{tpu_custom_call.1} parent=11 // pred_region
          _
        $region36: #{tpu_custom_call.1} parent=11 // pred_fallthru
          _
        // Predicated region
        $region37: #{tpu_custom_call.1} parent=11 // pred_check
          %p439 = pneg %p225
        $region38: #{tpu_custom_call.1} parent=11 // pred_check_branch
          %441 = sbr.rel (%p439) target = $region40
        $region39: #{tpu_custom_call.1} parent=11 // pred_region
          _
        $region40: #{tpu_custom_call.1} parent=11 // pred_fallthru
          _
        // Predicated region
        $region41: #{tpu_custom_call.1} parent=11 // pred_check
          %p442 = pneg %p246
        $region42: #{tpu_custom_call.1} parent=11 // pred_check_branch
          %444 = sbr.rel (%p442) target = $region44
        $region43: #{tpu_custom_call.1} parent=11 // pred_region
          _
        $region44: #{tpu_custom_call.1} parent=11 // pred_fallthru
          _
        // Predicated region
        $region45: #{tpu_custom_call.1} parent=11 // pred_check
          %p445 = pneg %p267
        $region46: #{tpu_custom_call.1} parent=11 // pred_check_branch
          %447 = sbr.rel (%p445) target = $region48
        $region47: #{tpu_custom_call.1} parent=11 // pred_region
          _
        $region48: #{tpu_custom_call.1} parent=11 // pred_fallthru
          _
        // Predicated region
        $region49: #{tpu_custom_call.1} parent=11 // pred_check
          %p448 = pneg %p288
        $region50: #{tpu_custom_call.1} parent=11 // pred_check_branch
          %450 = sbr.rel (%p448) target = $region52
        $region51: #{tpu_custom_call.1} parent=11 // pred_region
          _
        $region52: #{tpu_custom_call.1} parent=11 // pred_fallthru
          _
        // Predicated region
        $region53: #{tpu_custom_call.1} parent=11 // pred_check
          %p451 = pneg %p309
        $region54: #{tpu_custom_call.1} parent=11 // pred_check_branch
          %453 = sbr.rel (%p451) target = $region56
        $region55: #{tpu_custom_call.1} parent=11 // pred_region
          _
        $region56: #{tpu_custom_call.1} parent=11 // pred_fallthru
          _
        // Predicated region
        $region57: #{tpu_custom_call.1} parent=11 // pred_check
          %p454 = pneg %p330
        $region58: #{tpu_custom_call.1} parent=11 // pred_check_branch
          %456 = sbr.rel (%p454) target = $region60
        $region59: #{tpu_custom_call.1} parent=11 // pred_region
          _
        $region60: #{tpu_custom_call.1} parent=11 // pred_fallthru
          _
        // Predicated region
        $region61: #{tpu_custom_call.1} parent=11 // pred_check
          %p457 = pneg %p351
        $region62: #{tpu_custom_call.1} parent=11 // pred_check_branch
          %459 = sbr.rel (%p457) target = $region64
        $region63: #{tpu_custom_call.1} parent=11 // pred_region
          _
        $region64: #{tpu_custom_call.1} parent=11 // pred_fallthru
          _
        // Predicated region
        $region65: #{tpu_custom_call.1} parent=11 // pred_check
          %p460 = pneg %p372
        $region66: #{tpu_custom_call.1} parent=11 // pred_check_branch
          %462 = sbr.rel (%p460) target = $region68
        $region67: #{tpu_custom_call.1} parent=11 // pred_region
          _
        $region68: #{tpu_custom_call.1} parent=11 // pred_fallthru
          _
      $region12: #{tpu_custom_call.1} parent=5 // pred_fallthru
        _
      %p463 = scmp.lt.s32.totalorder %s26, 2
      // Predicated region
      $region69: #{tpu_custom_call.1} parent=5 // pred_check
        %p464 = pneg %p463
      $region70: #{tpu_custom_call.1} parent=5 // pred_check_branch
        %466 = sbr.rel (%p464) target = $region72
      $region71: #{tpu_custom_call.1} parent=5 // pred_region
        // Predicated region
        $region73: #{tpu_custom_call.1} parent=71 // pred_check
          %p467 = pneg %p46
        $region74: #{tpu_custom_call.1} parent=71 // pred_check_branch
          %469 = sbr.rel (%p467) target = $region76
        $region75: #{tpu_custom_call.1} parent=71 // pred_region
          %p470 = scmp.lt.s32.totalorder %s26, 1
          %s471 = scalar_select %p470, %s26, 1
          %s472 = smul.addr %s471, 8
          %s473 = scalar_lea.vmem %s0, %s472
        $region76: #{tpu_custom_call.1} parent=71 // pred_fallthru
          _
        // Predicated region
        $region77: #{tpu_custom_call.1} parent=71 // pred_check
          %p474 = pneg %p72
        $region78: #{tpu_custom_call.1} parent=71 // pred_check_branch
          %476 = sbr.rel (%p474) target = $region80
        $region79: #{tpu_custom_call.1} parent=71 // pred_region
          %s477 = smul.u32 2, %s26
          %p478 = scmp.lt.s32.totalorder %s477, 3
          %s479 = scalar_select %p478, %s477, 3
          %s480 = smul.addr %s479, 8
          %s481 = scalar_lea.vmem %s1, %s480
          %s482 = smul.u32 2, %s26
        $region80: #{tpu_custom_call.1} parent=71 // pred_fallthru
          _
      $region72: #{tpu_custom_call.1} parent=5 // pred_fallthru
        _
      %p483 = scmp.le.s32.totalorder 1, %s26
      %p484 = scmp.lt.s32.totalorder %s26, 3
      %p485 = pnand %p483, %p484
      %p486 = pneg %p485
      // Predicated region
      $region81: #{tpu_custom_call.1} parent=5 // pred_check
        _
      $region82: #{tpu_custom_call.1} parent=5 // pred_check_branch
        %488 = sbr.rel (%p485) target = $region84
      $region83: #{tpu_custom_call.1} parent=5 // pred_region
        %s489 = ssub.s32 %s26, 1
        // Predicated region
        $region85: #{tpu_custom_call.1} parent=83 // pred_check
          %p490 = pneg %p99
        $region86: #{tpu_custom_call.1} parent=83 // pred_check_branch
          %492 = sbr.rel (%p490) target = $region88
        $region87: #{tpu_custom_call.1} parent=83 // pred_region
          %493 = dma.done [#allocation5], 64
        $region88: #{tpu_custom_call.1} parent=83 // pred_fallthru
          _
        %p494 = scmp.lt.s32.totalorder %s31, 1
        %s495 = scalar_select %p494, %s31, 1
        %s496 = smul.addr %s495, 8
        %s497 = scalar_lea.vmem %s0, %s496
        %p498 = pneg %p52
        %p499 = pneg %p49
        %s500 = smul.u32 2, %s31
        %p501 = scmp.lt.s32.totalorder %s500, 3
        %s502 = scalar_select %p501, %s500, 3
        %s503 = smul.addr %s502, 8
        %s504 = scalar_lea.vmem %s1, %s503
        %p505 = pneg %p78
        %p506 = pneg %p75
        %p507 = pneg %p99
        %p508 = pneg %p96
        %p509 = pneg %p120
        %p510 = pneg %p117
        %p511 = pneg %p141
        %p512 = pneg %p138
        %p513 = pneg %p162
        %p514 = pneg %p159
        %p515 = pneg %p183
        %p516 = pneg %p180
        %p517 = pneg %p204
        %p518 = pneg %p201
        %p519 = pneg %p225
        %p520 = pneg %p222
        %p521 = pneg %p246
        %p522 = pneg %p243
        %p523 = pneg %p267
        %p524 = pneg %p264
        %p525 = pneg %p288
        %p526 = pneg %p285
        %p527 = pneg %p309
        %p528 = pneg %p306
        %p529 = pneg %p330
        %p530 = pneg %p327
        %p531 = pneg %p351
        %p532 = pneg %p348
        %p533 = pneg %p372
        %p534 = pneg %p369
        %p535 = pneg %p398
        %p536 = pneg %p395
        %s537 = sand.u32 %s385, 1
        %s538 = scalar_lea.sflag [#allocation6], %s537
        %s539 = sand.u32 %s385, 1
        %s540 = smul.addr %s539, 8
        %s541 = scalar_lea.vmem [#allocation7], %s540
        %p542 = scmp.lt.s32.totalorder %s31, 1
        %s543 = scalar_select %p542, %s31, 1
        %s544 = smul.addr %s543, 8
        %s545 = scalar_lea.vmem %s0, %s544
        %s546 = smul.u32 2, %s31
        %p547 = scmp.lt.s32.totalorder %s546, 3
        %s548 = scalar_select %p547, %s546, 3
        %s549 = smul.addr %s548, 8
        %s550 = scalar_lea.vmem %s1, %s549
        %s551 = smul.u32 2, %s31
        %v553 = vld [vmem:[%s550] sm:$0xff]
        %v554 = vld [vmem:[%s550 + $0x8] sm:$0xff]
        %v555 = vpack.c.bf16 %v554, %v553
        %v556 = vld [vmem:[%s4] sm:$0xf]
        %v557 = vld [vmem:[%s4 + $0x4] sm:$0xf]
        %v558 = vld [vmem:[%s5] sm:$0x1]
        %v560 = vlaneseq
        %v561 = vshrl.u32 %v560, 7
        %v562 = vsub.s32 0, %v561
        %v563 = vrot.slane %v558, %v562
        %v567 = vunpack.c.l.b16 %v556
        %v568 = vunpack.c.l.b16 %v557
        %v569 = vpack.c.b16 %v568, %v567
        %vm571 = vcmask 130048
        %v573 = vsel %vm571, %v555, 0
        %575 = vmatprep.subr.bf16.mxu0 0
        %576 = vmatpush1.bf16.msra.mxu0 %v569
        %577 = vmatprep.subr.bf16.mxu0 0
        %578 = vmatpush1.bf16.msra.mxu0 0
        %579 = vmatprep.subr.bf16.mxu0 0
        %580 = vmatpush1.bf16.msra.mxu0 0
        %581 = vmatprep.subr.bf16.mxu0 0
        %582 = vmatpush1.bf16.msra.mxu0 0
        %583 = vmatprep.subr.bf16.mxu0 0
        %584 = vmatpush1.bf16.msra.mxu0 0
        %585 = vmatprep.subr.bf16.mxu0 0
        %586 = vmatpush1.bf16.msra.mxu0 0
        %587 = vmatprep.subr.bf16.mxu0 0
        %588 = vmatpush1.bf16.msra.mxu0 0
        %589 = vmatprep.subr.bf16.mxu0 0
        %590 = vmatpush1.bf16.msra.mxu0 0
        %591 = vmatprep.subr.bf16.mxu0 0
        %592 = vmatpush1.bf16.msra.mxu0 0
        %593 = vmatprep.subr.bf16.mxu0 0
        %594 = vmatpush1.bf16.msra.mxu0 0
        %595 = vmatprep.subr.bf16.mxu0 0
        %596 = vmatpush1.bf16.msra.mxu0 0
        %597 = vmatprep.subr.bf16.mxu0 0
        %598 = vmatpush1.bf16.msra.mxu0 0
        %599 = vmatprep.subr.bf16.mxu0 0
        %600 = vmatpush1.bf16.msra.mxu0 0
        %601 = vmatprep.subr.bf16.mxu0 0
        %602 = vmatpush1.bf16.msra.mxu0 0
        %603 = vmatprep.subr.bf16.mxu0 0
        %604 = vmatpush1.bf16.msra.mxu0 0
        %605 = vmatprep.subr.bf16.mxu0 0
        %606 = vmatpush1.bf16.msra.mxu0 0
        %607 = vmatprep.mubr.bf16.mxu0 0
        %608 = vmatmul.mubr.bf16.gmra.mrb[0].mxu0 %v573
        %v609 = vpop.f32.mrb[0].mxu0
        %v610 = vadd.f32 %v563, %v609
        %v611 = vpop.f32.mrb[0].mxu0
        %v612 = vpop.f32.mrb[0].mxu0
        %v613 = vadd.f32 %v563, %v612
        %v614 = vpop.f32.mrb[0].mxu0
        %615 = vdwg.mxu0
        %v616 = vxor.u32 %v610, 2147483648
        %v617 = vxor.u32 %v613, 2147483648
        %v618 = vmul.f32 %v616, 1.442695
        %v619 = vpow.pop %v618
        %v620 = vmul.f32 %v617, 1.442695
        %v621 = vpow.pop %v620
        %v622 = vadd.f32 %v619, 1.0
        %v623 = vadd.f32 %v621, 1.0
        %v624 = vrcp.pop %v622
        %v625 = vmul.f32 1.0, %v624
        %v626 = vrcp.pop %v623
        %v627 = vmul.f32 1.0, %v626
        %v628 = vmul.f32 %v610, %v625
        %v629 = vmul.f32 %v613, %v627
        %v630 = vpack.c.bf16 %v629, %v628
        %v631 = vld [vmem:[%s6] sm:$0xf]
        %v632 = vld [vmem:[%s6 + $0x4] sm:$0xf]
        %v633 = vld [vmem:[%s6 + $0x8] sm:$0xf]
        %v634 = vld [vmem:[%s6 + $0xc] sm:$0xf]
        %v635 = vld [vmem:[%s7] sm:$0x1]
        %v637 = vlaneseq
        %v638 = vshrl.u32 %v637, 7
        %v639 = vsub.s32 0, %v638
        %v640 = vrot.slane %v635, %v639
        %v646 = vunpack.c.l.b16 %v631
        %v647 = vunpack.c.l.b16 %v632
        %v648 = vunpack.c.l.b16 %v633
        %v649 = vunpack.c.l.b16 %v634
        %v650 = vpack.c.b16 %v647, %v646
        %v651 = vpack.c.b16 %v649, %v648
        %vm654 = vcmask 261120
        %v656 = vsel %vm654, %v630, 0
        %658 = vmatprep.subr.bf16.mxu0 0
        %659 = vmatpush1.bf16.msra.mxu0 %v650
        %660 = vmatprep.subr.bf16.mxu0 0
        %661 = vmatpush1.bf16.msra.mxu0 %v651
        %662 = vmatprep.subr.bf16.mxu0 0
        %663 = vmatpush1.bf16.msra.mxu0 0
        %664 = vmatprep.subr.bf16.mxu0 0
        %665 = vmatpush1.bf16.msra.mxu0 0
        %666 = vmatprep.subr.bf16.mxu0 0
        %667 = vmatpush1.bf16.msra.mxu0 0
        %668 = vmatprep.subr.bf16.mxu0 0
        %669 = vmatpush1.bf16.msra.mxu0 0
        %670 = vmatprep.subr.bf16.mxu0 0
        %671 = vmatpush1.bf16.msra.mxu0 0
        %672 = vmatprep.subr.bf16.mxu0 0
        %673 = vmatpush1.bf16.msra.mxu0 0
        %674 = vmatprep.subr.bf16.mxu0 0
        %675 = vmatpush1.bf16.msra.mxu0 0
        %676 = vmatprep.subr.bf16.mxu0 0
        %677 = vmatpush1.bf16.msra.mxu0 0
        %678 = vmatprep.subr.bf16.mxu0 0
        %679 = vmatpush1.bf16.msra.mxu0 0
        %680 = vmatprep.subr.bf16.mxu0 0
        %681 = vmatpush1.bf16.msra.mxu0 0
        %682 = vmatprep.subr.bf16.mxu0 0
        %683 = vmatpush1.bf16.msra.mxu0 0
        %684 = vmatprep.subr.bf16.mxu0 0
        %685 = vmatpush1.bf16.msra.mxu0 0
        %686 = vmatprep.subr.bf16.mxu0 0
        %687 = vmatpush1.bf16.msra.mxu0 0
        %688 = vmatprep.subr.bf16.mxu0 0
        %689 = vmatpush1.bf16.msra.mxu0 0
        %690 = vmatprep.mubr.bf16.mxu0 0
        %691 = vmatmul.mubr.bf16.gmra.mrb[0].mxu0 %v656
        %v692 = vpop.f32.mrb[0].mxu0
        %v693 = vadd.f32 %v640, %v692
        %v694 = vpop.f32.mrb[0].mxu0
        %v695 = vpop.f32.mrb[0].mxu0
        %v696 = vadd.f32 %v640, %v695
        %v697 = vpop.f32.mrb[0].mxu0
        %698 = vdwg.mxu0
        %v699 = vpack.c.bf16 %v696, %v693
        %700 = vst.msk [vmem:[#allocation2] sm:$0xff] %vm654, %v699
        %v701 = vld [vmem:[#allocation4] sm:$0xf]
        %v702 = vld [vmem:[%s3] sm:$0xff]
        %704 = vset.pattern.permute.xlu0 0
        %705 = vperm.xlu0 %704, %v702
        %v706 = vpop.permute.xlu0 %705
        %v708 = vld [vmem:[#allocation2] sm:$0xff]
        %v710 = vsel %vm571, %v701, 0
        %712 = vmatprep.subr.bf16.mxu0 0
        %713 = vmatpush1.bf16.msra.mxu0 %v708
        %714 = vmatprep.subr.bf16.mxu0 0
        %715 = vmatpush1.bf16.msra.mxu0 0
        %716 = vmatprep.subr.bf16.mxu0 0
        %717 = vmatpush1.bf16.msra.mxu0 0
        %718 = vmatprep.subr.bf16.mxu0 0
        %719 = vmatpush1.bf16.msra.mxu0 0
        %720 = vmatprep.subr.bf16.mxu0 0
        %721 = vmatpush1.bf16.msra.mxu0 0
        %722 = vmatprep.subr.bf16.mxu0 0
        %723 = vmatpush1.bf16.msra.mxu0 0
        %724 = vmatprep.subr.bf16.mxu0 0
        %725 = vmatpush1.bf16.msra.mxu0 0
        %726 = vmatprep.subr.bf16.mxu0 0
        %727 = vmatpush1.bf16.msra.mxu0 0
        %728 = vmatprep.subr.bf16.mxu0 0
        %729 = vmatpush1.bf16.msra.mxu0 0
        %730 = vmatprep.subr.bf16.mxu0 0
        %731 = vmatpush1.bf16.msra.mxu0 0
        %732 = vmatprep.subr.bf16.mxu0 0
        %733 = vmatpush1.bf16.msra.mxu0 0
        %734 = vmatprep.subr.bf16.mxu0 0
        %735 = vmatpush1.bf16.msra.mxu0 0
        %736 = vmatprep.subr.bf16.mxu0 0
        %737 = vmatpush1.bf16.msra.mxu0 0
        %738 = vmatprep.subr.bf16.mxu0 0
        %739 = vmatpush1.bf16.msra.mxu0 0
        %740 = vmatprep.subr.bf16.mxu0 0
        %741 = vmatpush1.bf16.msra.mxu0 0
        %742 = vmatprep.subr.bf16.mxu0 0
        %743 = vmatpush1.bf16.msra.mxu0 0
        %744 = vmatprep.mubr.bf16.mxu0 0
        %745 = vmatmul.mubr.bf16.gmra.mrb[0].mxu0 %v710
        %v746 = vpop.f32.mrb[0].mxu0
        %v747 = vadd.f32 0.0, %v746
        %v748 = vpop.f32.mrb[0].mxu0
        %v749 = vpop.f32.mrb[0].mxu0
        %v750 = vpop.f32.mrb[0].mxu0
        %751 = vdwg.mxu0
        %v752 = vmul.f32 %v706, %v747
        %753 = vst.msk [vmem:[#allocation3] sm:$0xff] %vm654, %v752
        %v754 = vld [vmem:[%s545] sm:$0xff]
        %v755 = vpack.c.bf16 %v754, %v754
        %v756 = vld [vmem:[%s8] sm:$0x3]
        %v757 = vld [vmem:[%s9] sm:$0x1]
        %v759 = vlaneseq
        %v760 = vshrl.u32 %v759, 7
        %v761 = vsub.s32 0, %v760
        %v762 = vrot.slane %v757, %v761
        %vm764 = vcmask 31744
        %v766 = vsel %vm764, %v755, 0
        %vm768 = vcmask 1041408
        %v770 = vsel %vm768, %v756, 0
        %772 = vmatprep.subr.bf16.mxu0 0
        %773 = vmatpush1.bf16.msra.mxu0 %v770
        %774 = vmatprep.subr.bf16.mxu0 0
        %775 = vmatpush1.bf16.msra.mxu0 0
        %776 = vmatprep.subr.bf16.mxu0 0
        %777 = vmatpush1.bf16.msra.mxu0 0
        %778 = vmatprep.subr.bf16.mxu0 0
        %779 = vmatpush1.bf16.msra.mxu0 0
        %780 = vmatprep.subr.bf16.mxu0 0
        %781 = vmatpush1.bf16.msra.mxu0 0
        %782 = vmatprep.subr.bf16.mxu0 0
        %783 = vmatpush1.bf16.msra.mxu0 0
        %784 = vmatprep.subr.bf16.mxu0 0
        %785 = vmatpush1.bf16.msra.mxu0 0
        %786 = vmatprep.subr.bf16.mxu0 0
        %787 = vmatpush1.bf16.msra.mxu0 0
        %788 = vmatprep.subr.bf16.mxu0 0
        %789 = vmatpush1.bf16.msra.mxu0 0
        %790 = vmatprep.subr.bf16.mxu0 0
        %791 = vmatpush1.bf16.msra.mxu0 0
        %792 = vmatprep.subr.bf16.mxu0 0
        %793 = vmatpush1.bf16.msra.mxu0 0
        %794 = vmatprep.subr.bf16.mxu0 0
        %795 = vmatpush1.bf16.msra.mxu0 0
        %796 = vmatprep.subr.bf16.mxu0 0
        %797 = vmatpush1.bf16.msra.mxu0 0
        %798 = vmatprep.subr.bf16.mxu0 0
        %799 = vmatpush1.bf16.msra.mxu0 0
        %800 = vmatprep.subr.bf16.mxu0 0
        %801 = vmatpush1.bf16.msra.mxu0 0
        %802 = vmatprep.subr.bf16.mxu0 0
        %803 = vmatpush1.bf16.msra.mxu0 0
        %804 = vmatprep.mubr.bf16.mxu0 0
        %805 = vmatmul.mubr.bf16.gmra.mrb[0].mxu0 %v766
        %v806 = vpop.f32.mrb[0].mxu0
        %v807 = vadd.f32 %v762, %v806
        %v808 = vpop.f32.mrb[0].mxu0
        %v809 = vpop.f32.mrb[0].mxu0
        %v810 = vpop.f32.mrb[0].mxu0
        %811 = vdwg.mxu0
        %v812 = vld [vmem:[#allocation3] sm:$0xff]
        %v813 = vadd.f32 %v812, %v807
        %v814 = vpack.c.bf16 %v813, %v813
        %v815 = vld [vmem:[%s10] sm:$0xf]
        %v816 = vld [vmem:[%s10 + $0x4] sm:$0xf]
        %v817 = vld [vmem:[%s10 + $0x8] sm:$0xf]
        %v818 = vld [vmem:[%s10 + $0xc] sm:$0xf]
        %v819 = vld [vmem:[%s11] sm:$0x1]
        %v821 = vlaneseq
        %v822 = vshrl.u32 %v821, 7
        %v823 = vsub.s32 0, %v822
        %v824 = vrot.slane %v819, %v823
        %v830 = vunpack.c.l.b16 %v815
        %v831 = vunpack.c.l.b16 %v816
        %v832 = vunpack.c.l.b16 %v817
        %v833 = vunpack.c.l.b16 %v818
        %v834 = vpack.c.b16 %v831, %v830
        %v835 = vpack.c.b16 %v833, %v832
        %v839 = vsel %vm654, %v814, 0
        %841 = vmatprep.subr.bf16.mxu0 0
        %842 = vmatpush1.bf16.msra.mxu0 %v834
        %843 = vmatprep.subr.bf16.mxu0 0
        %844 = vmatpush1.bf16.msra.mxu0 %v835
        %845 = vmatprep.subr.bf16.mxu0 0
        %846 = vmatpush1.bf16.msra.mxu0 0
        %847 = vmatprep.subr.bf16.mxu0 0
        %848 = vmatpush1.bf16.msra.mxu0 0
        %849 = vmatprep.subr.bf16.mxu0 0
        %850 = vmatpush1.bf16.msra.mxu0 0
        %851 = vmatprep.subr.bf16.mxu0 0
        %852 = vmatpush1.bf16.msra.mxu0 0
        %853 = vmatprep.subr.bf16.mxu0 0
        %854 = vmatpush1.bf16.msra.mxu0 0
        %855 = vmatprep.subr.bf16.mxu0 0
        %856 = vmatpush1.bf16.msra.mxu0 0
        %857 = vmatprep.subr.bf16.mxu0 0
        %858 = vmatpush1.bf16.msra.mxu0 0
        %859 = vmatprep.subr.bf16.mxu0 0
        %860 = vmatpush1.bf16.msra.mxu0 0
        %861 = vmatprep.subr.bf16.mxu0 0
        %862 = vmatpush1.bf16.msra.mxu0 0
        %863 = vmatprep.subr.bf16.mxu0 0
        %864 = vmatpush1.bf16.msra.mxu0 0
        %865 = vmatprep.subr.bf16.mxu0 0
        %866 = vmatpush1.bf16.msra.mxu0 0
        %867 = vmatprep.subr.bf16.mxu0 0
        %868 = vmatpush1.bf16.msra.mxu0 0
        %869 = vmatprep.subr.bf16.mxu0 0
        %870 = vmatpush1.bf16.msra.mxu0 0
        %871 = vmatprep.subr.bf16.mxu0 0
        %872 = vmatpush1.bf16.msra.mxu0 0
        %873 = vmatprep.mubr.bf16.mxu0 0
        %874 = vmatmul.mubr.bf16.gmra.mrb[0].mxu0 %v839
        %v875 = vpop.f32.mrb[0].mxu0
        %v876 = vadd.f32 %v824, %v875
        %v877 = vpop.f32.mrb[0].mxu0
        %v878 = vpop.f32.mrb[0].mxu0
        %v879 = vpop.f32.mrb[0].mxu0
        %880 = vdwg.mxu0
        %v881 = vmax.f32 %v876, 0.0
        %v882 = vpack.c.bf16 %v881, %v881
        %v883 = vld [vmem:[%s12] sm:$0xf]
        %v884 = vld [vmem:[%s12 + $0x4] sm:$0xf]
        %v885 = vld [vmem:[%s12 + $0x8] sm:$0xf]
        %v886 = vld [vmem:[%s12 + $0xc] sm:$0xf]
        %v887 = vld [vmem:[%s13] sm:$0x1]
        %v889 = vlaneseq
        %v890 = vshrl.u32 %v889, 7
        %v891 = vsub.s32 0, %v890
        %v892 = vrot.slane %v887, %v891
        %v898 = vunpack.c.l.b16 %v883
        %v899 = vunpack.c.l.b16 %v884
        %v900 = vunpack.c.l.b16 %v885
        %v901 = vunpack.c.l.b16 %v886
        %v902 = vpack.c.b16 %v899, %v898
        %v903 = vpack.c.b16 %v901, %v900
        %v907 = vsel %vm654, %v882, 0
        %909 = vmatprep.subr.bf16.mxu0 0
        %910 = vmatpush1.bf16.msra.mxu0 %v902
        %911 = vmatprep.subr.bf16.mxu0 0
        %912 = vmatpush1.bf16.msra.mxu0 %v903
        %913 = vmatprep.subr.bf16.mxu0 0
        %914 = vmatpush1.bf16.msra.mxu0 0
        %915 = vmatprep.subr.bf16.mxu0 0
        %916 = vmatpush1.bf16.msra.mxu0 0
        %917 = vmatprep.subr.bf16.mxu0 0
        %918 = vmatpush1.bf16.msra.mxu0 0
        %919 = vmatprep.subr.bf16.mxu0 0
        %920 = vmatpush1.bf16.msra.mxu0 0
        %921 = vmatprep.subr.bf16.mxu0 0
        %922 = vmatpush1.bf16.msra.mxu0 0
        %923 = vmatprep.subr.bf16.mxu0 0
        %924 = vmatpush1.bf16.msra.mxu0 0
        %925 = vmatprep.subr.bf16.mxu0 0
        %926 = vmatpush1.bf16.msra.mxu0 0
        %927 = vmatprep.subr.bf16.mxu0 0
        %928 = vmatpush1.bf16.msra.mxu0 0
        %929 = vmatprep.subr.bf16.mxu0 0
        %930 = vmatpush1.bf16.msra.mxu0 0
        %931 = vmatprep.subr.bf16.mxu0 0
        %932 = vmatpush1.bf16.msra.mxu0 0
        %933 = vmatprep.subr.bf16.mxu0 0
        %934 = vmatpush1.bf16.msra.mxu0 0
        %935 = vmatprep.subr.bf16.mxu0 0
        %936 = vmatpush1.bf16.msra.mxu0 0
        %937 = vmatprep.subr.bf16.mxu0 0
        %938 = vmatpush1.bf16.msra.mxu0 0
        %939 = vmatprep.subr.bf16.mxu0 0
        %940 = vmatpush1.bf16.msra.mxu0 0
        %941 = vmatprep.mubr.bf16.mxu0 0
        %942 = vmatmul.mubr.bf16.gmra.mrb[0].mxu0 %v907
        %v943 = vpop.f32.mrb[0].mxu0
        %v944 = vadd.f32 %v892, %v943
        %v945 = vpop.f32.mrb[0].mxu0
        %v946 = vpop.f32.mrb[0].mxu0
        %v947 = vpop.f32.mrb[0].mxu0
        %948 = vdwg.mxu0
        %v949 = vmax.f32 %v944, 0.0
        %v950 = vpack.c.bf16 %v949, %v949
        %v951 = vld [vmem:[%s14] sm:$0xf]
        %v952 = vld [vmem:[%s14 + $0x4] sm:$0xf]
        %v953 = vld [vmem:[%s14 + $0x8] sm:$0xf]
        %v954 = vld [vmem:[%s14 + $0xc] sm:$0xf]
        %v955 = vld [vmem:[%s15] sm:$0x1]
        %v957 = vlaneseq
        %v958 = vshrl.u32 %v957, 7
        %v959 = vsub.s32 0, %v958
        %v960 = vrot.slane %v955, %v959
        %v966 = vunpack.c.l.b16 %v951
        %v967 = vunpack.c.l.b16 %v952
        %v968 = vunpack.c.l.b16 %v953
        %v969 = vunpack.c.l.b16 %v954
        %v970 = vpack.c.b16 %v967, %v966
        %v971 = vpack.c.b16 %v969, %v968
        %v975 = vsel %vm654, %v950, 0
        %977 = vmatprep.subr.bf16.mxu0 0
        %978 = vmatpush1.bf16.msra.mxu0 %v970
        %979 = vmatprep.subr.bf16.mxu0 0
        %980 = vmatpush1.bf16.msra.mxu0 %v971
        %981 = vmatprep.subr.bf16.mxu0 0
        %982 = vmatpush1.bf16.msra.mxu0 0
        %983 = vmatprep.subr.bf16.mxu0 0
        %984 = vmatpush1.bf16.msra.mxu0 0
        %985 = vmatprep.subr.bf16.mxu0 0
        %986 = vmatpush1.bf16.msra.mxu0 0
        %987 = vmatprep.subr.bf16.mxu0 0
        %988 = vmatpush1.bf16.msra.mxu0 0
        %989 = vmatprep.subr.bf16.mxu0 0
        %990 = vmatpush1.bf16.msra.mxu0 0
        %991 = vmatprep.subr.bf16.mxu0 0
        %992 = vmatpush1.bf16.msra.mxu0 0
        %993 = vmatprep.subr.bf16.mxu0 0
        %994 = vmatpush1.bf16.msra.mxu0 0
        %995 = vmatprep.subr.bf16.mxu0 0
        %996 = vmatpush1.bf16.msra.mxu0 0
        %997 = vmatprep.subr.bf16.mxu0 0
        %998 = vmatpush1.bf16.msra.mxu0 0
        %999 = vmatprep.subr.bf16.mxu0 0
        %1000 = vmatpush1.bf16.msra.mxu0 0
        %1001 = vmatprep.subr.bf16.mxu0 0
        %1002 = vmatpush1.bf16.msra.mxu0 0
        %1003 = vmatprep.subr.bf16.mxu0 0
        %1004 = vmatpush1.bf16.msra.mxu0 0
        %1005 = vmatprep.subr.bf16.mxu0 0
        %1006 = vmatpush1.bf16.msra.mxu0 0
        %1007 = vmatprep.subr.bf16.mxu0 0
        %1008 = vmatpush1.bf16.msra.mxu0 0
        %1009 = vmatprep.mubr.bf16.mxu0 0
        %1010 = vmatmul.mubr.bf16.gmra.mrb[0].mxu0 %v975
        %v1011 = vpop.f32.mrb[0].mxu0
        %v1012 = vadd.f32 %v960, %v1011
        %v1013 = vpop.f32.mrb[0].mxu0
        %v1014 = vpop.f32.mrb[0].mxu0
        %v1015 = vpop.f32.mrb[0].mxu0
        %1016 = vdwg.mxu0
        %1017 = vst [vmem:[%s541] sm:$0xff] %v1012
        %s1018 = sand.u32 %s385, 1
        %s1019 = scalar_lea.sflag [#allocation6], %s1018
        %s1020 = sand.u32 %s385, 1
        %s1021 = smul.addr %s1020, 8
        %s1022 = scalar_lea.vmem [#allocation7], %s1021
        // Predicated region
        $region89: #{tpu_custom_call.1} parent=83 // pred_check
          %p1023 = pneg %p395
        $region90: #{tpu_custom_call.1} parent=83 // pred_check_branch
          %1025 = sbr.rel (%p1023) target = $region92
        $region91: #{tpu_custom_call.1} parent=83 // pred_region
          %s1027 = ssub.s32 128, 128
          %1028 = vsyncadd %s1019, %s1027
          %s1029 = smul.addr %s31, 128
          %s1030 = scalar_lea.hbm %s16, %s1029
          %s1032 = sshll.u32 %s1022, 4
          %s1033 = int_to_ptr.vmem [resolvable:$true] %s1032
          %1035 = dma.vmem_to_hbm [thread:$0]  %s1033, 128, %s1030, %s1019
        $region92: #{tpu_custom_call.1} parent=83 // pred_fallthru
          _
      $region84: #{tpu_custom_call.1} parent=5 // pred_fallthru
        _
      %p1036 = scmp.le.s32.totalorder 2, %s26
      // Predicated region
      $region93: #{tpu_custom_call.1} parent=5 // pred_check
        %p1037 = pneg %p1036
      $region94: #{tpu_custom_call.1} parent=5 // pred_check_branch
        %1039 = sbr.rel (%p1037) target = $region96
      $region95: #{tpu_custom_call.1} parent=5 // pred_region
        %s1040 = ssub.s32 %s26, 2
        // Predicated region
        $region97: #{tpu_custom_call.1} parent=95 // pred_check
          %p1041 = pneg %p401
        $region98: #{tpu_custom_call.1} parent=95 // pred_check_branch
          %1043 = sbr.rel (%p1041) target = $region100
        $region99: #{tpu_custom_call.1} parent=95 // pred_region
          %s1044 = sand.u32 %s386, 1
          %s1045 = scalar_lea.sflag [#allocation6], %s1044
          %s1046 = sand.u32 %s386, 1
          %s1047 = smul.addr %s1046, 8
          %s1048 = scalar_lea.vmem [#allocation7], %s1047
          %1049 = dma.done %s1045, 128
        $region100: #{tpu_custom_call.1} parent=95 // pred_fallthru
          _
      $region96: #{tpu_custom_call.1} parent=5 // pred_fallthru
        _
    $region6: #{tpu_custom_call.1} parent=1 // loop_footer
      %s30 = sadd.s32 1, %s26
    $region7: #{tpu_custom_call.1} parent=1 // loop_footer_branch
      %25 = sbr.rel target = $region3
    $region8: #{tpu_custom_call.1} parent=1 // loop_exit
      _
    %1050 = vsyncpa [#allocation5], 1
    %s1051 = scalar_lea.sflag [#allocation5], 1
    %1052 = vsyncpa %s1051, 1
    %1053 = vsyncpa [#allocation6], 1
    %s1054 = scalar_lea.sflag [#allocation6], 1
    %1055 = vsyncpa %s1054, 1

</llo_original>
